<compile_context>
chip_gen: v6e
topology: v6e:2x2x1
jax: 0.10.0
libtpu: 0.0.40
codegen_flags: <defaults>
</compile_context>

<pallas_src>
from functools import partial
from math import gcd

import jax
import jax.numpy as jnp
import numpy as np
from jax import lax
from jax.experimental import pallas as pl
from jax.experimental.pallas import tpu as pltpu


def _ceil_div(a: int, b: int) -> int:
    return -(-a // b)


def _chunk_geometry(t: int, chunk: int, step: int) -> tuple[int, int]:
    """(n_chunks, pad_len) with a short-sequence guard (pad up to one chunk)."""
    if t >= chunk:
        n_chunks = _ceil_div(t - chunk, step) + 1
    else:
        n_chunks = 1  # guard: T < chunk -> a single, padded window
    pad_len = (n_chunks - 1) * step + chunk - t
    return n_chunks, pad_len


def _vmem_capacity_bytes() -> int:
    try:
        info = pltpu.get_tpu_info()
        for attr in ("vmem_capacity_bytes", "vmem_size_bytes", "vmem_bytes"):
            v = getattr(info, attr, None)
            if v:
                return int(v)
    except Exception:
        pass
    return 64 << 20  # conservative default: v7x per-TensorCore VMEM


def _pick_group(chunk: int, step: int, t: int, c: int, dtype) -> int:
    """Pick k | gcd(chunk, step, t) that folds k time rows into the lane axis.

    Grouping is a free row-major reshape in HBM; it raises lane density of the
    copy's vld/vst stream when C < 128.  Score ~ useful bytes per (possibly
    masked) vst = min(chunk/k, sublane_tile) * min(k*C, 128); ties prefer the
    smaller k (less sublane padding, better window-start alignment).
    """
    if c >= 128:
        return 1
    itemsize = jnp.dtype(dtype).itemsize
    sub = 8 * max(1, 4 // itemsize)  # rows per VMEM tile: 8 f32 / 16 bf16 / 32 i8
    g = gcd(gcd(chunk, step), t)
    best_k, best_score = 1, -1
    for k in range(1, g + 1):
        if g % k:
            continue
        score = min(chunk // k, sub) * min(k * c, 128)
        if score > best_score:
            best_k, best_score = k, score
    return best_k


def _chunk_kernel(x_ref, o_ref, *, chunk: int, step: int, chunks_per_tile: int,
                  n_full: int, tail_tile, tail_j, tail_start, tail_valid,
                  unroll: int):
    # x_ref: (T, C)  whole (unpadded) sequence of the current batch element.
    # o_ref: (chunks_per_tile, chunk, C)  output block of windows.
    tile = pl.program_id(1)
    base = tile * chunks_per_tile
    pot = step & (-step)  # largest power-of-two divisor of step (align hint)

    if n_full > 0:
        def body(j, carry):
            # Clamp so reads stay in-bounds for (a) output blocks that overhang
            # n_chunks (their writes are clipped on writeback) and (b) the tail
            # window slot, which is rewritten correctly below.
            cidx = jnp.minimum(base + j, n_full - 1)
            start = cidx * step
            if pot > 1:
                start = pl.multiple_of(start, pot)
            o_ref[j] = x_ref[pl.ds(start, chunk), :]
            return carry

        lax.fori_loop(0, chunks_per_tile, body, 0, unroll=unroll)

    if tail_tile is not None:
        # Single zero-padded tail window, handled once, outside the hot loop.
        @pl.when(tile == tail_tile)
        def _():
            if tail_valid > 0:
                o_ref[tail_j, :tail_valid, :] = x_ref[pl.ds(tail_start,
                                                            tail_valid), :]
            o_ref[tail_j, tail_valid:, :] = jnp.zeros(
                (chunk - tail_valid, o_ref.shape[-1]), dtype=o_ref.dtype)


def _make_chunk_pallas(x: jax.Array, chunk: int, step: int,
                       tile_chunks: int | None) -> jax.Array:
    b, t, c = x.shape
    n_chunks, pad_len = _chunk_geometry(t, chunk, step)
    itemsize = jnp.dtype(x.dtype).itemsize

    # ---- output-block sizing: HBM-writeback bound; target ~4 MiB blocks ----
    bytes_per_chunk = chunk * c * itemsize
    if tile_chunks is None:
        tile_chunks = max(1, (4 << 20) // max(bytes_per_chunk, 1))
    tile_chunks = max(1, min(tile_chunks, n_chunks))

    # ---- generation-aware VMEM budget / buffering ----
    cap = _vmem_capacity_bytes()
    budget = int(cap * 0.7)
    in_block = t * c * itemsize

    in_bufs = 2  # keep the resident sequence double-buffered whenever it fits
    if 2 * in_block + 2 * tile_chunks * bytes_per_chunk > budget:
        in_bufs = 1
    while (in_bufs * in_block + 2 * tile_chunks * bytes_per_chunk > budget
           and tile_chunks > 1):
        tile_chunks //= 2
    vmem_need = in_bufs * in_block + 2 * tile_chunks * bytes_per_chunk

    # ---- tail-window placement (hoisted out of the kernel's hot loop) ----
    n_full = n_chunks - 1 if pad_len > 0 else n_chunks
    if pad_len > 0:
        tail_idx = n_chunks - 1
        tail_tile = tail_idx // tile_chunks
        tail_j = tail_idx % tile_chunks
        tail_start = tail_idx * step
        tail_valid = max(0, min(chunk, t - tail_start))
    else:
        tail_tile = tail_j = tail_start = tail_valid = None

    unroll = int(min(8, tile_chunks))

    in_spec_kwargs = {}
    if in_bufs == 1:
        # Input block index is constant along the chunk axis: single-buffer it
        # only when double-buffering would not fit the VMEM budget.
        in_spec_kwargs["pipeline_mode"] = pl.Buffered(1)

    cp_kwargs = dict(dimension_semantics=("parallel", "parallel"))
    if vmem_need > (16 << 20):  # v5e default scoped VMEM limit
        cp_kwargs["vmem_limit_bytes"] = int(
            min(vmem_need + vmem_need // 4 + (1 << 20), int(cap * 0.85)))

    kernel = partial(
        _chunk_kernel, chunk=chunk, step=step, chunks_per_tile=tile_chunks,
        n_full=n_full, tail_tile=tail_tile, tail_j=tail_j,
        tail_start=tail_start, tail_valid=tail_valid, unroll=unroll)

    bytes_accessed = (b * t * c + b * n_chunks * chunk * c) * itemsize

    return pl.pallas_call(
        kernel,
        out_shape=jax.ShapeDtypeStruct((b, n_chunks, chunk, c), x.dtype),
        grid_spec=pltpu.PrefetchScalarGridSpec(
            num_scalar_prefetch=0,
            grid=(b, pl.cdiv(n_chunks, tile_chunks)),
            in_specs=[
                # Whole sequence of one batch element resident in VMEM across
                # the chunk-tile axis (block index constant along it).
                pl.BlockSpec((None, t, c), lambda ib, it: (ib, 0, 0),
                             **in_spec_kwargs),
            ],
            out_specs=pl.BlockSpec((None, tile_chunks, chunk, c),
                                   lambda ib, it: (ib, it, 0, 0)),
        ),
        compiler_params=pltpu.CompilerParams(**cp_kwargs),
        cost_estimate=pl.CostEstimate(flops=0, transcendentals=0,
                                      bytes_accessed=bytes_accessed),
    )(x)


def fliped_make_chunk(x: jax.Array, chunk_size: int, step_size: int,
                      *, tile_chunks: int | None = None,
                      allow_grouping: bool = True) -> jax.Array:
    """Pallas implementation of FlipedMakeChunk.forward.  x: (B, T, C)."""
    b, t, c = x.shape

    # ---- chunk_size == step_size: non-overlapping windows -> pure reshape ----
    if chunk_size == step_size:
        _, pad_len = _chunk_geometry(t, chunk_size, step_size)
        if pad_len > 0:
            tail = jnp.flip(x, axis=1)[:, :pad_len, :]
            xp = jnp.concatenate([x, tail], axis=1)
        else:
            xp = x
        s = xp.shape[1] // chunk_size
        return xp.reshape(b, s, chunk_size, c)

    # ---- lane-density grouping for C < 128 (free row-major reshape) ----
    k = _pick_group(chunk_size, step_size, t, c, x.dtype) if allow_grouping else 1
    if k > 1:
        xg = x.reshape(b, t // k, k * c)
        out = _make_chunk_pallas(xg, chunk_size // k, step_size // k, tile_chunks)
        s = out.shape[1]
        return out.reshape(b, s, chunk_size, c)

    return _make_chunk_pallas(x, chunk_size, step_size, tile_chunks)


def _reference(x: np.ndarray, chunk: int, step: int) -> np.ndarray:
    """Pure-numpy replica of the PyTorch forward pass (with the same guard)."""
    b, t, c = x.shape
    n_chunks, pad_len = _chunk_geometry(t, chunk, step)
    if chunk == step:
        tail = x[:, ::-1, :][:, :pad_len, :]
        xp = np.concatenate([x, tail], axis=1)
        s = xp.shape[1] // chunk
        return xp.reshape(b, s, chunk, c)
    xp = np.concatenate([x, np.zeros((b, pad_len, c), x.dtype)], axis=1)
    idx = np.arange(n_chunks)[:, None] * step + np.arange(chunk)[None, :]
    return xp[:, idx, :]  # (b, s, chunk, c)


if __name__ == "__main__":
    # NOTE: FlipedMakeChunk has no learnable parameters (Unfold/Rearrange only).
    key = jax.random.PRNGKey(0)

    # Case 1: chunk != step, zero-padded tail (C < 128, no grouping triggers).
    B, T, C = 2, 18, 32
    x = jax.random.normal(key, (B, T, C), dtype=jnp.float32)
    out1 = jax.block_until_ready(fliped_make_chunk(x, 8, 4))
    np.testing.assert_allclose(np.asarray(out1), _reference(np.asarray(x), 8, 4),
                               rtol=0, atol=0)

    # Case 2: chunk == step (flip tail) -> reshape short-circuit, no kernel.
    out2 = jax.block_until_ready(fliped_make_chunk(x, 8, 8))
    np.testing.assert_allclose(np.asarray(out2), _reference(np.asarray(x), 8, 8),
                               rtol=0, atol=0)

    # Case 3: lane-dense C=128, pad-free, forced small chunk tile so the last
    # output block overhangs n_chunks (exercises the clamp/clip path).
    x3 = jax.random.normal(jax.random.PRNGKey(1), (2, 40, 128), jnp.float32)
    out3 = jax.block_until_ready(fliped_make_chunk(x3, 8, 4, tile_chunks=4))
    np.testing.assert_allclose(np.asarray(out3),
                               _reference(np.asarray(x3), 8, 4), rtol=0, atol=0)

    # Case 4: C=32 with chunk=32/step=16 -> lane grouping (k=4) + padded tail.
    x4 = jax.random.normal(jax.random.PRNGKey(2), (2, 56, 32), jnp.float32)
    out4 = jax.block_until_ready(fliped_make_chunk(x4, 32, 16))
    np.testing.assert_allclose(np.asarray(out4),
                               _reference(np.asarray(x4), 32, 16), rtol=0, atol=0)

    # Case 5: short sequence T < chunk -> single padded window (guarded path).
    x5 = jax.random.normal(jax.random.PRNGKey(3), (2, 5, 32), jnp.float32)
    out5 = jax.block_until_ready(fliped_make_chunk(x5, 8, 4))
    np.testing.assert_allclose(np.asarray(out5),
                               _reference(np.asarray(x5), 8, 4), rtol=0, atol=0)

    print("KERNEL_OK")
</pallas_src>

<mosaic_0001>
module attributes {stable_mosaic.version = 11 : i64} {
  func.func @_chunk_kernel(%arg0: i32, %arg1: i32, %arg2: memref<1x18x32xf32, #tpu.memory_space<vmem>>, %arg3: memref<1x4x8x32xf32, #tpu.memory_space<vmem>>) attributes {dimension_semantics = [#tpu.dimension_semantics<parallel>, #tpu.dimension_semantics<parallel>], iteration_bounds = array<i64: 2, 1>, scalar_prefetch = 0 : i64, scratch_operands = 0 : i64, tpu.core_type = #tpu.core_type<tc>, window_params = [{transform_indices = @transform_0, window_bounds = array<i64: 1, 18, 32>}, {transform_indices = @transform_1, window_bounds = array<i64: 1, 4, 8, 32>}]} {
    %c4_i32 = arith.constant 4 : i32
    %0 = arith.muli %arg1, %c4_i32 : i32
    %c0_i32 = arith.constant 0 : i32
    %1 = arith.addi %0, %c0_i32 : i32
    %c2_i32 = arith.constant 2 : i32
    %2 = arith.minsi %1, %c2_i32 : i32
    %c4_i32_0 = arith.constant 4 : i32
    %3 = arith.muli %2, %c4_i32_0 : i32
    %4 = tpu.assume_multiple %3, 4 : i32
    %c0 = arith.constant 0 : index
    %5 = arith.index_cast %4 : i32 to index
    %c0_1 = arith.constant 0 : index
    %6 = vector.load %arg2[%c0, %5, %c0_1] : memref<1x18x32xf32, #tpu.memory_space<vmem>>, vector<1x8x32xf32>
    %7 = vector.shape_cast %6 : vector<1x8x32xf32> to vector<8x32xf32>
    %c0_2 = arith.constant 0 : index
    %8 = arith.index_cast %c0_i32 : i32 to index
    %c0_3 = arith.constant 0 : index
    %c0_4 = arith.constant 0 : index
    %9 = vector.load %arg3[%c0_2, %8, %c0_3, %c0_4] : memref<1x4x8x32xf32, #tpu.memory_space<vmem>>, vector<1x1x8x32xf32>
    %10 = vector.shape_cast %9 : vector<1x1x8x32xf32> to vector<8x32xf32>
    %11 = vector.shape_cast %7 : vector<8x32xf32> to vector<1x1x8x32xf32>
    tpu.vector_store %arg3[%c0_2, %8, %c0_3, %c0_4], %11 {strides = array<i32>} : memref<1x4x8x32xf32, #tpu.memory_space<vmem>>, vector<1x1x8x32xf32>,
    %c1_i32 = arith.constant 1 : i32
    %12 = arith.addi %0, %c1_i32 : i32
    %c2_i32_5 = arith.constant 2 : i32
    %13 = arith.minsi %12, %c2_i32_5 : i32
    %c4_i32_6 = arith.constant 4 : i32
    %14 = arith.muli %13, %c4_i32_6 : i32
    %15 = tpu.assume_multiple %14, 4 : i32
    %c0_7 = arith.constant 0 : index
    %16 = arith.index_cast %15 : i32 to index
    %c0_8 = arith.constant 0 : index
    %17 = vector.load %arg2[%c0_7, %16, %c0_8] : memref<1x18x32xf32, #tpu.memory_space<vmem>>, vector<1x8x32xf32>
    %18 = vector.shape_cast %17 : vector<1x8x32xf32> to vector<8x32xf32>
    %c0_9 = arith.constant 0 : index
    %19 = arith.index_cast %c1_i32 : i32 to index
    %c0_10 = arith.constant 0 : index
    %c0_11 = arith.constant 0 : index
    %20 = vector.load %arg3[%c0_9, %19, %c0_10, %c0_11] : memref<1x4x8x32xf32, #tpu.memory_space<vmem>>, vector<1x1x8x32xf32>
    %21 = vector.shape_cast %20 : vector<1x1x8x32xf32> to vector<8x32xf32>
    %22 = vector.shape_cast %18 : vector<8x32xf32> to vector<1x1x8x32xf32>
    tpu.vector_store %arg3[%c0_9, %19, %c0_10, %c0_11], %22 {strides = array<i32>} : memref<1x4x8x32xf32, #tpu.memory_space<vmem>>, vector<1x1x8x32xf32>,
    %c2_i32_12 = arith.constant 2 : i32
    %23 = arith.addi %0, %c2_i32_12 : i32
    %c2_i32_13 = arith.constant 2 : i32
    %24 = arith.minsi %23, %c2_i32_13 : i32
    %c4_i32_14 = arith.constant 4 : i32
    %25 = arith.muli %24, %c4_i32_14 : i32
    %26 = tpu.assume_multiple %25, 4 : i32
    %c0_15 = arith.constant 0 : index
    %27 = arith.index_cast %26 : i32 to index
    %c0_16 = arith.constant 0 : index
    %28 = vector.load %arg2[%c0_15, %27, %c0_16] : memref<1x18x32xf32, #tpu.memory_space<vmem>>, vector<1x8x32xf32>
    %29 = vector.shape_cast %28 : vector<1x8x32xf32> to vector<8x32xf32>
    %c0_17 = arith.constant 0 : index
    %30 = arith.index_cast %c2_i32_12 : i32 to index
    %c0_18 = arith.constant 0 : index
    %c0_19 = arith.constant 0 : index
    %31 = vector.load %arg3[%c0_17, %30, %c0_18, %c0_19] : memref<1x4x8x32xf32, #tpu.memory_space<vmem>>, vector<1x1x8x32xf32>
    %32 = vector.shape_cast %31 : vector<1x1x8x32xf32> to vector<8x32xf32>
    %33 = vector.shape_cast %29 : vector<8x32xf32> to vector<1x1x8x32xf32>
    tpu.vector_store %arg3[%c0_17, %30, %c0_18, %c0_19], %33 {strides = array<i32>} : memref<1x4x8x32xf32, #tpu.memory_space<vmem>>, vector<1x1x8x32xf32>,
    %c3_i32 = arith.constant 3 : i32
    %34 = arith.addi %0, %c3_i32 : i32
    %c2_i32_20 = arith.constant 2 : i32
    %35 = arith.minsi %34, %c2_i32_20 : i32
    %c4_i32_21 = arith.constant 4 : i32
    %36 = arith.muli %35, %c4_i32_21 : i32
    %37 = tpu.assume_multiple %36, 4 : i32
    %c0_22 = arith.constant 0 : index
    %38 = arith.index_cast %37 : i32 to index
    %c0_23 = arith.constant 0 : index
    %39 = vector.load %arg2[%c0_22, %38, %c0_23] : memref<1x18x32xf32, #tpu.memory_space<vmem>>, vector<1x8x32xf32>
    %40 = vector.shape_cast %39 : vector<1x8x32xf32> to vector<8x32xf32>
    %c0_24 = arith.constant 0 : index
    %41 = arith.index_cast %c3_i32 : i32 to index
    %c0_25 = arith.constant 0 : index
    %c0_26 = arith.constant 0 : index
    %42 = vector.load %arg3[%c0_24, %41, %c0_25, %c0_26] : memref<1x4x8x32xf32, #tpu.memory_space<vmem>>, vector<1x1x8x32xf32>
    %43 = vector.shape_cast %42 : vector<1x1x8x32xf32> to vector<8x32xf32>
    %44 = vector.shape_cast %40 : vector<8x32xf32> to vector<1x1x8x32xf32>
    tpu.vector_store %arg3[%c0_24, %41, %c0_25, %c0_26], %44 {strides = array<i32>} : memref<1x4x8x32xf32, #tpu.memory_space<vmem>>, vector<1x1x8x32xf32>,
    %c4_i32_27 = arith.constant 4 : i32
    %c0_i32_28 = arith.constant 0 : i32
    %45 = arith.cmpi eq, %arg1, %c0_i32_28 : i32
    %46 = arith.extui %45 : i1 to i32
    %c0_i32_29 = arith.constant 0 : i32
    %47 = arith.cmpi ne, %46, %c0_i32_29 : i32
    scf.if %47 {
      %c0_30 = arith.constant 0 : index
      %c12 = arith.constant 12 : index
      %c0_31 = arith.constant 0 : index
      %48 = vector.load %arg2[%c0_30, %c12, %c0_31] : memref<1x18x32xf32, #tpu.memory_space<vmem>>, vector<1x6x32xf32>
      %49 = vector.shape_cast %48 : vector<1x6x32xf32> to vector<6x32xf32>
      %c0_32 = arith.constant 0 : index
      %c3 = arith.constant 3 : index
      %c0_33 = arith.constant 0 : index
      %c0_34 = arith.constant 0 : index
      %50 = vector.load %arg3[%c0_32, %c3, %c0_33, %c0_34] : memref<1x4x8x32xf32, #tpu.memory_space<vmem>>, vector<1x1x6x32xf32>
      %51 = vector.shape_cast %50 : vector<1x1x6x32xf32> to vector<6x32xf32>
      %52 = vector.shape_cast %49 : vector<6x32xf32> to vector<1x1x6x32xf32>
      tpu.vector_store %arg3[%c0_32, %c3, %c0_33, %c0_34], %52 {strides = array<i32>} : memref<1x4x8x32xf32, #tpu.memory_space<vmem>>, vector<1x1x6x32xf32>,
      %cst = arith.constant 0.000000e+00 : f32
      %53 = vector.broadcast %cst : f32 to vector<2x32xf32>
      %c0_35 = arith.constant 0 : index
      %c3_36 = arith.constant 3 : index
      %c6 = arith.constant 6 : index
      %c0_37 = arith.constant 0 : index
      %54 = vector.load %arg3[%c0_35, %c3_36, %c6, %c0_37] : memref<1x4x8x32xf32, #tpu.memory_space<vmem>>, vector<1x1x2x32xf32>
      %55 = vector.shape_cast %54 : vector<1x1x2x32xf32> to vector<2x32xf32>
      %56 = vector.shape_cast %53 : vector<2x32xf32> to vector<1x1x2x32xf32>
      tpu.vector_store %arg3[%c0_35, %c3_36, %c6, %c0_37], %56 {strides = array<i32>} : memref<1x4x8x32xf32, #tpu.memory_space<vmem>>, vector<1x1x2x32xf32>,
    } else {
    }
    return
  }
  func.func @transform_0(%arg0: i32, %arg1: i32) -> (i32, i32, i32) {
    %c0_i32 = arith.constant 0 : i32
    %c0_i32_0 = arith.constant 0 : i32
    %c0_i32_1 = arith.constant 0 : i32
    return %arg0, %c0_i32, %c0_i32_0 : i32, i32, i32
  }
  func.func @transform_1(%arg0: i32, %arg1: i32) -> (i32, i32, i32, i32) {
    %c0_i32 = arith.constant 0 : i32
    %c0_i32_0 = arith.constant 0 : i32
    %c0_i32_1 = arith.constant 0 : i32
    return %arg0, %arg1, %c0_i32, %c0_i32_0 : i32, i32, i32, i32
  }
}

</mosaic_0001>

<llo_original>
// kernel: tpu_custom_call.1
$region0: #{tpu_custom_call.1}
  #allocation0 [shape = 'u32[]', space=smem, size = 0x4, offset = 0x4, fixed_abs, tag = 'smem constant byte address 0x4 - core index']
  #allocation1 [shape = 'u32[144,128]{1,0:T(1,128)}', space=vmem, size = 0x12000, scoped, tag = 'internal scratch']
  %s0 = inlined_call_operand.vmem [shape: f32[2,18,32], index: 0, kind: input, shape index: {}]
  %s1 = inlined_call_operand.hbm [shape: f32[2,4,8,32], index: 1, kind: output, shape index: {}]
  %s2 = sld [smem:[#allocation0]]
  $region41: #{tpu_custom_call.1} parent=0
    _
  %s4 = ssub.s32 1, %s2
  %s5 = scalar_select 0, %s4, %s2
  $region1: #{tpu_custom_call.1} parent=0
    #allocation2 [shape = 'u8[32768]{0}', space=vmem, size = 0x8000, scoped, tag = 'output window, operand 0']
    #allocation3 [shape = 's32[2]{0}', space=sflag, size = 0x8, scoped, tag = 'scoped memory for tpu_custom_call.1']
    %6 = vsyncpa [#allocation3], 0
    %s7 = scalar_lea.sflag [#allocation3], 1
    %8 = vsyncpa %s7, 0
    loop: start=0, step=1, limit=4
    $region2: #{tpu_custom_call.1} parent=1 // loop_pre_header
      _
    $region3: #{tpu_custom_call.1} parent=1 // loop_header
      %s10 = sphi 0, %s14
      %p11 = scmp.ge.s32.totalorder %s10, 4
      %s17 = sphi 0, %s29
      %s18 = sphi 0, %s25
      %s19 = sphi 0, %s17
      %s20 = sphi 0, %s18
      %s21 = sphi 0, %s19
      %s22 = sphi 0, %s20
      %s32 = sphi 0, %s34
      %s35 = sphi 0, %s32
      %s36 = sphi 0, %s35
      %s52 = sphi 0, %s36
      %s60 = sphi 0, %s62
      %s63 = sphi 0, %s60
      %s64 = sphi 0, %s63
      %s80 = sphi 0, %s64
    $region4: #{tpu_custom_call.1} parent=1 // loop_header_branch
      %13 = sbr.rel (%p11) target = $region8
    $region5: #{tpu_custom_call.1} parent=1 // loop_body
      %s15 = ssub.s32 %s10, 1
      %s16 = ssub.s32 %s10, 2
      %s23 = sadd.s32 1, %s18
      %p24 = scmp.ge.s32.totalorder %s23, 1
      %s25 = scalar_select %p24, 0, %s23
      %s26 = sadd.s32 1, %s17
      %s27 = scalar_select %p24, %s26, %s17
      %p28 = scmp.ge.s32.totalorder %s27, 2
      %s29 = scalar_select %p28, 0, %s27
      %s30 = ssub.s32 %s17, %s29
      %p31 = scmp.eq.s32.totalorder %s30, 0
      %s33 = sadd.s32 %s32, 1
      %s34 = scalar_select %p31, %s32, %s33
      %p37 = pneg %p31
      %p38 = scmp.eq.s32.totalorder %s10, 1
      %p39 = por %p37, %p38
      %p40 = scmp.ne.s32.totalorder %s32, %s35
      %p41 = scmp.eq.s32.totalorder %s10, 0
      %p42 = por %p40, %p41
      %p43 = scmp.ne.s32.totalorder %s32, %s35
      %p44 = scmp.eq.s32.totalorder %s15, 1
      %p45 = por %p43, %p44
      %p46 = scmp.ne.s32.totalorder %s35, %s36
      %p47 = scmp.eq.s32.totalorder %s15, 0
      %p48 = por %p46, %p47
      %p49 = scmp.ne.s32.totalorder %s35, %s36
      %p50 = scmp.eq.s32.totalorder %s16, 1
      %p51 = por %p49, %p50
      %p53 = scmp.ne.s32.totalorder %s36, %s52
      %p54 = scmp.eq.s32.totalorder %s16, 0
      %p55 = por %p53, %p54
      %s56 = ssub.s32 %s17, %s29
      %s57 = ssub.s32 %s18, %s25
      %s58 = sor.u32 %s56, %s57
      %p59 = scmp.eq.s32.totalorder %s58, 0
      %s61 = sadd.s32 %s60, 1
      %s62 = scalar_select %p59, %s60, %s61
      %p65 = pneg %p59
      %p66 = scmp.eq.s32.totalorder %s10, 1
      %p67 = por %p65, %p66
      %p68 = scmp.ne.s32.totalorder %s60, %s63
      %p69 = scmp.eq.s32.totalorder %s10, 0
      %p70 = por %p68, %p69
      %p71 = scmp.ne.s32.totalorder %s60, %s63
      %p72 = scmp.eq.s32.totalorder %s15, 1
      %p73 = por %p71, %p72
      %p74 = scmp.ne.s32.totalorder %s63, %s64
      %p75 = scmp.eq.s32.totalorder %s15, 0
      %p76 = por %p74, %p75
      %p77 = scmp.ne.s32.totalorder %s63, %s64
      %p78 = scmp.eq.s32.totalorder %s16, 1
      %p79 = por %p77, %p78
      %p81 = scmp.ne.s32.totalorder %s64, %s80
      %p82 = scmp.eq.s32.totalorder %s16, 0
      %p83 = por %p81, %p82
      %p84 = scmp.le.s32.totalorder 1, %s10
      %p85 = scmp.lt.s32.totalorder %s10, 3
      %p86 = pnand %p84, %p85
      %p87 = pneg %p86
      // Predicated region
      $region9: #{tpu_custom_call.1} parent=5 // pred_check
        _
      $region10: #{tpu_custom_call.1} parent=5 // pred_check_branch
        %89 = sbr.rel (%p86) target = $region12
      $region11: #{tpu_custom_call.1} parent=5 // pred_region
        %s90 = ssub.s32 %s10, 1
      $region12: #{tpu_custom_call.1} parent=5 // pred_fallthru
        _
      %p91 = scmp.lt.s32.totalorder %s10, 2
      // Predicated region
      $region13: #{tpu_custom_call.1} parent=5 // pred_check
        %p92 = pneg %p91
      $region14: #{tpu_custom_call.1} parent=5 // pred_check_branch
        %94 = sbr.rel (%p92) target = $region16
      $region15: #{tpu_custom_call.1} parent=5 // pred_region
        // Predicated region
        $region17: #{tpu_custom_call.1} parent=15 // pred_check
          %p95 = pneg %p42
        $region18: #{tpu_custom_call.1} parent=15 // pred_check_branch
          %97 = sbr.rel (%p95) target = $region20
        $region19: #{tpu_custom_call.1} parent=15 // pred_region
          %p98 = scmp.lt.s32.totalorder %s17, 1
          %s99 = scalar_select %p98, %s17, 1
          %s100 = smul.addr %s99, 3
          %s101 = smul.addr %s100, 8
          %s102 = scalar_lea.vmem %s0, %s101
        $region20: #{tpu_custom_call.1} parent=15 // pred_fallthru
          _
      $region16: #{tpu_custom_call.1} parent=5 // pred_fallthru
        _
      %p103 = scmp.le.s32.totalorder 1, %s10
      %p104 = scmp.lt.s32.totalorder %s10, 3
      %p105 = pnand %p103, %p104
      %p106 = pneg %p105
      // Predicated region
      $region21: #{tpu_custom_call.1} parent=5 // pred_check
        _
      $region22: #{tpu_custom_call.1} parent=5 // pred_check_branch
        %108 = sbr.rel (%p105) target = $region24
      $region23: #{tpu_custom_call.1} parent=5 // pred_region
        %s109 = ssub.s32 %s10, 1
        %p110 = scmp.lt.s32.totalorder %s19, 1
        %s111 = scalar_select %p110, %s19, 1
        %s112 = smul.addr %s111, 3
        %s113 = smul.addr %s112, 8
        %s114 = scalar_lea.vmem %s0, %s113
        %p115 = pneg %p48
        %p116 = pneg %p45
        %p117 = pneg %p76
        %p118 = pneg %p73
        %s119 = sand.u32 %s63, 1
        %s120 = scalar_lea.sflag [#allocation3], %s119
        %s121 = sand.u32 %s63, 1
        %s122 = smul.addr %s121, 32
        %s123 = scalar_lea.vmem [#allocation2], %s122
        %p124 = scmp.lt.s32.totalorder %s19, 1
        %s125 = scalar_select %p124, %s19, 1
        %s126 = smul.addr %s125, 3
        %s127 = smul.addr %s126, 8
        %s128 = scalar_lea.vmem %s0, %s127
        %s129 = smul.u32 4, %s20
        %s130 = smul.u32 %s20, 4
        %p131 = scmp.lt.s32.totalorder %s130, 2
        %s132 = scalar_select %p131, %s130, 2
        %s133 = smul.u32 %s132, 4
        %s134 = scalar_lea.vmem %s128, %s133
        %v135 = vld [vmem:[%s134] sm:$0xff]
        %vm136 = vcmask 261120
        %137 = vst.msk [vmem:[%s123] sm:$0xff] %vm136, %v135
        %s138 = sadd.s32 %s130, 1
        %p139 = scmp.lt.s32.totalorder %s138, 2
        %s140 = scalar_select %p139, %s138, 2
        %s141 = smul.u32 %s140, 4
        %s142 = scalar_lea.vmem %s128, %s141
        %v143 = vld [vmem:[%s142] sm:$0xff]
        %s144 = scalar_lea.vmem %s123, 8 [#allocation2]
        %145 = vst.msk [vmem:[%s144] sm:$0xff] %vm136, %v143
        %s146 = sadd.s32 %s130, 2
        %p147 = scmp.lt.s32.totalorder %s146, 2
        %s148 = scalar_select %p147, %s146, 2
        %s149 = smul.u32 %s148, 4
        %s150 = scalar_lea.vmem %s128, %s149
        %v151 = vld [vmem:[%s150] sm:$0xff]
        %s152 = scalar_lea.vmem %s123, 16 [#allocation2]
        %153 = vst.msk [vmem:[%s152] sm:$0xff] %vm136, %v151
        %s154 = sadd.s32 %s130, 3
        %p155 = scmp.lt.s32.totalorder %s154, 2
        %s156 = scalar_select %p155, %s154, 2
        %s157 = smul.u32 %s156, 4
        %s158 = scalar_lea.vmem %s128, %s157
        %v159 = vld [vmem:[%s158] sm:$0xff]
        %s160 = scalar_lea.vmem %s123, 24 [#allocation2]
        %161 = vst.msk [vmem:[%s160] sm:$0xff] %vm136, %v159
        %p162 = scmp.eq.s32.totalorder %s20, 0
        // Predicated region
        $region25: #{tpu_custom_call.1} parent=23 // pred_check
          %p163 = pneg %p162
        $region26: #{tpu_custom_call.1} parent=23 // pred_check_branch
          %165 = sbr.rel (%p163) target = $region28
        $region27: #{tpu_custom_call.1} parent=23 // pred_region
          %v166 = vld [vmem:[%s128 + $0xc] sm:$0x3f]
          %vm167 = vcmask 259072
          %168 = vst.msk [vmem:[%s160] sm:$0x3f] %vm167, %v166
          %vm169 = vcmask 254976
          %170 = vst.msk [vmem:[%s160 + $0x6] sm:$0x3] %vm169, 0.0
        $region28: #{tpu_custom_call.1} parent=23 // pred_fallthru
          _
        %s171 = sand.u32 %s63, 1
        %s172 = scalar_lea.sflag [#allocation3], %s171
        %s173 = sand.u32 %s63, 1
        %s174 = smul.addr %s173, 32
        %s175 = scalar_lea.vmem [#allocation2], %s174
        // Predicated region
        $region29: #{tpu_custom_call.1} parent=23 // pred_check
          %p176 = pneg %p73
        $region30: #{tpu_custom_call.1} parent=23 // pred_check_branch
          %178 = sbr.rel (%p176) target = $region32
        $region31: #{tpu_custom_call.1} parent=23 // pred_region
          %s179 = smul.u32 4, %s20
          %s181 = ssub.s32 512, 512
          %182 = vsyncadd %s172, %s181
          %s183 = smul.addr %s19, 4
          %s184 = sadd.s32 %s179, %s183
          %s185 = smul.addr %s184, 128
          %s186 = scalar_lea.hbm %s1, %s185
          %s187 = sshll.u32 %s175, 4
          %s188 = int_to_ptr.vmem [resolvable:$true] %s187
          %193 = dma.vmem_to_hbm [thread:$0]  %s188, 512, %s186, %s172, 128, 128, 8
        $region32: #{tpu_custom_call.1} parent=23 // pred_fallthru
          _
      $region24: #{tpu_custom_call.1} parent=5 // pred_fallthru
        _
      %p194 = scmp.le.s32.totalorder 2, %s10
      // Predicated region
      $region33: #{tpu_custom_call.1} parent=5 // pred_check
        %p195 = pneg %p194
      $region34: #{tpu_custom_call.1} parent=5 // pred_check_branch
        %197 = sbr.rel (%p195) target = $region36
      $region35: #{tpu_custom_call.1} parent=5 // pred_region
        %s198 = ssub.s32 %s10, 2
        // Predicated region
        $region37: #{tpu_custom_call.1} parent=35 // pred_check
          %p199 = pneg %p79
        $region38: #{tpu_custom_call.1} parent=35 // pred_check_branch
          %201 = sbr.rel (%p199) target = $region40
        $region39: #{tpu_custom_call.1} parent=35 // pred_region
          %s202 = sand.u32 %s64, 1
          %s203 = scalar_lea.sflag [#allocation3], %s202
          %s204 = sand.u32 %s64, 1
          %s205 = smul.addr %s204, 32
          %s206 = scalar_lea.vmem [#allocation2], %s205
          %207 = dma.done %s203, 512
        $region40: #{tpu_custom_call.1} parent=35 // pred_fallthru
          _
      $region36: #{tpu_custom_call.1} parent=5 // pred_fallthru
        _
    $region6: #{tpu_custom_call.1} parent=1 // loop_footer
      %s14 = sadd.s32 1, %s10
    $region7: #{tpu_custom_call.1} parent=1 // loop_footer_branch
      %9 = sbr.rel target = $region3
    $region8: #{tpu_custom_call.1} parent=1 // loop_exit
      _
    %208 = vsyncpa [#allocation3], 1
    %s209 = scalar_lea.sflag [#allocation3], 1
    %210 = vsyncpa %s209, 1

</llo_original>
